<compile_context>
chip_gen: v7x
topology: tpu7x:2x2x1
jax: 0.10.0
libtpu: 0.0.40
codegen_flags: <defaults>
</compile_context>

<pallas_src>
import jax
import jax.numpy as jnp
from jax.experimental import pallas as pl
from jax.experimental.pallas import tpu as pltpu


def toy_mp_kernel(x_ref, w1_ref, b1_ref, w2_ref, b2_ref, o_ref):
    # net1: Linear(10 -> 10).  K/N are tiny; MXU padding is handled by Mosaic.
    h = jnp.dot(x_ref[...], w1_ref[...], preferred_element_type=jnp.float32)
    h = jnp.maximum(h + b1_ref[...], 0.0)          # bias + ReLU (f32 VPU)
    # net2: Linear(10 -> 5).
    out = jnp.dot(h, w2_ref[...], preferred_element_type=jnp.float32)
    o_ref[...] = (out + b2_ref[...]).astype(o_ref.dtype)


def _round_up(n, m):
    return -(-n // m) * m


_SMALL_BATCH = 256   # at/below this: one gridless whole-array VMEM call
_TARGET_TB = 8192    # ~320 KiB f32 x-tile; amortizes per-grid-step overhead


def toy_mp_forward(x, w1, b1, w2, b2):
    """x: (B, 10); w1: (10, 10); b1: (1, 10); w2: (10, 5); b2: (1, 5).

    Weights are stored pre-transposed as (in_features, out_features) so the
    kernel computes x @ W + b directly.  Returns (B, 5).
    """
    B, in_features = x.shape
    hidden = w1.shape[1]
    out_features = w2.shape[1]
    dtype = x.dtype

    if B <= _SMALL_BATCH:
        # Tiny batch: single gridless call, everything lives in VMEM.  No
        # pipeline prologue/epilogue, no padding, no slicing.
        vmem = pl.BlockSpec(memory_space=pltpu.MemorySpace.VMEM)
        return pl.pallas_call(
            toy_mp_kernel,
            out_shape=jax.ShapeDtypeStruct((B, out_features), dtype),
            in_specs=[vmem, vmem, vmem, vmem, vmem],
            out_specs=vmem,
        )(x, w1, b1, w2, b2)

    # Tiled batch.  Keep the tile count EVEN so the "parallel" batch axis
    # gives both v7x TensorCores balanced work; tile ~_TARGET_TB rows.
    n_tiles = 2 * pl.cdiv(B, 2 * _TARGET_TB)
    TB = _round_up(pl.cdiv(B, n_tiles), 8)
    B_pad = n_tiles * TB
    xp = jnp.pad(x, ((0, B_pad - B), (0, 0))) if B_pad != B else x

    out_padded = pl.pallas_call(
        toy_mp_kernel,
        out_shape=jax.ShapeDtypeStruct((B_pad, out_features), dtype),
        grid=(n_tiles,),
        in_specs=[
            # x: streamed batch tiles, kept at 10 columns (full last dim).
            pl.BlockSpec((TB, in_features), lambda i: (i, 0)),
            # Weights/biases: whole (tiny) arrays, VMEM-resident across steps.
            pl.BlockSpec((in_features, hidden), lambda i: (0, 0)),
            pl.BlockSpec((1, hidden), lambda i: (0, 0)),
            pl.BlockSpec((hidden, out_features), lambda i: (0, 0)),
            pl.BlockSpec((1, out_features), lambda i: (0, 0)),
        ],
        out_specs=pl.BlockSpec((TB, out_features), lambda i: (i, 0)),
        compiler_params=pltpu.CompilerParams(
            dimension_semantics=("parallel",)),  # 2 TCs on v7x split the batch
    )(xp, w1, b1, w2, b2)

    return out_padded[:B] if B_pad != B else out_padded


def init_params(key, in1=10, out1=10, out2=5, dtype=jnp.float32):
    """PyTorch-style default Linear init: U(-1/sqrt(fan_in), 1/sqrt(fan_in))."""
    k1, k2, k3, k4 = jax.random.split(key, 4)
    bound1 = 1.0 / (in1 ** 0.5)
    bound2 = 1.0 / (out1 ** 0.5)
    # Stored as (in_features, out_features), i.e. transposed vs torch's (out, in).
    w1 = jax.random.uniform(k1, (in1, out1), dtype, -bound1, bound1)
    b1 = jax.random.uniform(k2, (1, out1), dtype, -bound1, bound1)
    w2 = jax.random.uniform(k3, (out1, out2), dtype, -bound2, bound2)
    b2 = jax.random.uniform(k4, (1, out2), dtype, -bound2, bound2)
    return w1, b1, w2, b2


if __name__ == "__main__":
    key = jax.random.PRNGKey(0)
    kx, kp, kx2 = jax.random.split(key, 3)
    w1, b1, w2, b2 = init_params(kp)

    # --- small batch: exercises the gridless (single-call, VMEM) path ---
    batch = 8
    x = jax.random.normal(kx, (batch, 10), jnp.float32)
    out = jax.block_until_ready(toy_mp_forward(x, w1, b1, w2, b2))
    ref = jnp.maximum(x @ w1 + b1, 0.0) @ w2 + b2
    assert out.shape == (batch, 5)
    assert jnp.allclose(out, ref, atol=1e-4, rtol=1e-4)

    # --- larger batch: exercises the batch-tiled path (2 parallel tiles) ---
    big_batch = 1024
    xb = jax.random.normal(kx2, (big_batch, 10), jnp.float32)
    outb = jax.block_until_ready(toy_mp_forward(xb, w1, b1, w2, b2))
    refb = jnp.maximum(xb @ w1 + b1, 0.0) @ w2 + b2
    assert outb.shape == (big_batch, 5)
    assert jnp.allclose(outb, refb, atol=1e-4, rtol=1e-4)

    # TODO(synk): DDP / multi-device model-parallel placement (dev0/dev1) is
    # distributed plumbing, not part of the single-core forward math.
    print("KERNEL_OK")
</pallas_src>

<mosaic_0001>
module attributes {stable_mosaic.version = 11 : i64} {
  func.func @toy_mp_kernel(%arg0: memref<8x10xf32, #tpu.memory_space<vmem>>, %arg1: memref<10x10xf32, #tpu.memory_space<vmem>>, %arg2: memref<1x10xf32, #tpu.memory_space<vmem>>, %arg3: memref<10x5xf32, #tpu.memory_space<vmem>>, %arg4: memref<1x5xf32, #tpu.memory_space<vmem>>, %arg5: memref<8x5xf32, #tpu.memory_space<vmem>>) attributes {dimension_semantics = [], scalar_prefetch = 0 : i64, scratch_operands = 0 : i64, tpu.core_type = #tpu.core_type<tc>} {
    %c0 = arith.constant 0 : index
    %c0_0 = arith.constant 0 : index
    %0 = vector.load %arg0[%c0, %c0_0] : memref<8x10xf32, #tpu.memory_space<vmem>>, vector<8x10xf32>
    %c0_1 = arith.constant 0 : index
    %c0_2 = arith.constant 0 : index
    %1 = vector.load %arg1[%c0_1, %c0_2] : memref<10x10xf32, #tpu.memory_space<vmem>>, vector<10x10xf32>
    %cst = arith.constant dense<0.000000e+00> : vector<8x10xf32>
    %2 = tpu.matmul %0, %1, %cst {dimension_numbers = #tpu.dot_dimension_numbers<[1], [0], [0], [1], [0, 0, 1, 1], [], []>} : vector<8x10xf32>, vector<10x10xf32>, vector<8x10xf32> -> vector<8x10xf32>
    %c0_3 = arith.constant 0 : index
    %c0_4 = arith.constant 0 : index
    %3 = vector.load %arg2[%c0_3, %c0_4] : memref<1x10xf32, #tpu.memory_space<vmem>>, vector<1x10xf32>
    %4 = vector.broadcast %3 : vector<1x10xf32> to vector<8x10xf32>
    %5 = arith.addf %2, %4 : vector<8x10xf32>
    %cst_5 = arith.constant 0.000000e+00 : f32
    %6 = vector.broadcast %cst_5 : f32 to vector<8x10xf32>
    %7 = arith.maximumf %5, %6 : vector<8x10xf32>
    %c0_6 = arith.constant 0 : index
    %c0_7 = arith.constant 0 : index
    %8 = vector.load %arg3[%c0_6, %c0_7] : memref<10x5xf32, #tpu.memory_space<vmem>>, vector<10x5xf32>
    %cst_8 = arith.constant dense<0.000000e+00> : vector<8x5xf32>
    %9 = tpu.matmul %7, %8, %cst_8 {dimension_numbers = #tpu.dot_dimension_numbers<[1], [0], [0], [1], [0, 0, 1, 1], [], []>} : vector<8x10xf32>, vector<10x5xf32>, vector<8x5xf32> -> vector<8x5xf32>
    %c0_9 = arith.constant 0 : index
    %c0_10 = arith.constant 0 : index
    %10 = vector.load %arg4[%c0_9, %c0_10] : memref<1x5xf32, #tpu.memory_space<vmem>>, vector<1x5xf32>
    %11 = vector.broadcast %10 : vector<1x5xf32> to vector<8x5xf32>
    %12 = arith.addf %9, %11 : vector<8x5xf32>
    %c0_11 = arith.constant 0 : index
    %c0_12 = arith.constant 0 : index
    %13 = vector.load %arg5[%c0_11, %c0_12] : memref<8x5xf32, #tpu.memory_space<vmem>>, vector<8x5xf32>
    tpu.vector_store %arg5[%c0_11, %c0_12], %12 {strides = array<i32>} : memref<8x5xf32, #tpu.memory_space<vmem>>, vector<8x5xf32>,
    return
  }
}

</mosaic_0001>

<llo_original>
// kernel: tpu_custom_call.1
$region0: #{tpu_custom_call.1}
  #allocation0 [shape = 'u32[]', space=smem, size = 0x4, offset = 0x4, fixed_abs, tag = 'smem constant byte address 0x4 - core index']
  #allocation1 [shape = 'u32[144,128]{1,0:T(1,128)}', space=vmem, size = 0x12000, scoped, tag = 'internal scratch']
  %s0 = inlined_call_operand.vmem [shape: f32[8,10], index: 0, kind: input, shape index: {}]
  %s1 = inlined_call_operand.vmem [shape: f32[10,10], index: 1, kind: input, shape index: {}]
  %s2 = inlined_call_operand.vmem [shape: f32[1,10], index: 2, kind: input, shape index: {}]
  %s3 = inlined_call_operand.vmem [shape: f32[10,5], index: 3, kind: input, shape index: {}]
  %s4 = inlined_call_operand.vmem [shape: f32[1,5], index: 4, kind: input, shape index: {}]
  %s5 = inlined_call_operand.hbm [shape: f32[8,5], index: 5, kind: output, shape index: {}]
  %s6 = sld [smem:[#allocation0]]
  $region30: #{tpu_custom_call.1} parent=0
    _
  %s8 = ssub.s32 1, %s6
  %s9 = scalar_select 0, %s8, %s6
  $region1: #{tpu_custom_call.1} parent=0
    #allocation2 [shape = 'u8[4096]{0}', space=vmem, size = 0x1000, scoped, tag = 'output window, operand 0, single buffered']
    #allocation3 [shape = 's32[1]{0}', space=sflag, size = 0x4, scoped, tag = 'scoped memory for tpu_custom_call.1']
    %10 = vsyncpa [#allocation3], 0
    // Predicated region
    $region2: #{tpu_custom_call.1} parent=1 // pred_check
      _
    $region3: #{tpu_custom_call.1} parent=1 // pred_check_branch
      %12 = sbr.rel (0) target = $region5
    $region4: #{tpu_custom_call.1} parent=1 // pred_region
      _
    $region5: #{tpu_custom_call.1} parent=1 // pred_fallthru
      _
    // Predicated region
    $region6: #{tpu_custom_call.1} parent=1 // pred_check
      _
    $region7: #{tpu_custom_call.1} parent=1 // pred_check_branch
      %14 = sbr.rel (0) target = $region9
    $region8: #{tpu_custom_call.1} parent=1 // pred_region
      _
    $region9: #{tpu_custom_call.1} parent=1 // pred_fallthru
      _
    // Predicated region
    $region10: #{tpu_custom_call.1} parent=1 // pred_check
      _
    $region11: #{tpu_custom_call.1} parent=1 // pred_check_branch
      %16 = sbr.rel (0) target = $region13
    $region12: #{tpu_custom_call.1} parent=1 // pred_region
      _
    $region13: #{tpu_custom_call.1} parent=1 // pred_fallthru
      _
    // Predicated region
    $region14: #{tpu_custom_call.1} parent=1 // pred_check
      _
    $region15: #{tpu_custom_call.1} parent=1 // pred_check_branch
      %18 = sbr.rel (0) target = $region17
    $region16: #{tpu_custom_call.1} parent=1 // pred_region
      _
    $region17: #{tpu_custom_call.1} parent=1 // pred_fallthru
      _
    // Predicated region
    $region18: #{tpu_custom_call.1} parent=1 // pred_check
      _
    $region19: #{tpu_custom_call.1} parent=1 // pred_check_branch
      %20 = sbr.rel (0) target = $region21
    $region20: #{tpu_custom_call.1} parent=1 // pred_region
      _
    $region21: #{tpu_custom_call.1} parent=1 // pred_fallthru
      _
    %v21 = vld [vmem:[%s0] sm:$0xff]
    %v22 = vld [vmem:[%s1] sm:$0xff]
    %v23 = vld [vmem:[%s1 + $0x8] sm:$0x3]
    %v24 = vld [vmem:[%s2] sm:$0x1]
    %v26 = vlaneseq
    %v27 = vshrl.u32 %v26, 7
    %v28 = vsub.s32 0, %v27
    %v29 = vrot.slane %v24, %v28
    %vm31 = vcmask 80896
    %v33 = vsel %vm31, %v21, 0
    %vm35 = vcmask 1041408
    %v37 = vsel %vm35, %v23, 0
    %39 = vmatprep.subr.mxu0 0.0
    %40 = vmatpush1.msra.mxu0 %v22
    %41 = vmatprep.subr.mxu0 0.0
    %42 = vmatpush1.msra.mxu0 %v37
    %43 = vmatprep.subr.mxu0 0.0
    %44 = vmatpush1.msra.mxu0 0.0
    %45 = vmatprep.subr.mxu0 0.0
    %46 = vmatpush1.msra.mxu0 0.0
    %47 = vmatprep.subr.mxu0 0.0
    %48 = vmatpush1.msra.mxu0 0.0
    %49 = vmatprep.subr.mxu0 0.0
    %50 = vmatpush1.msra.mxu0 0.0
    %51 = vmatprep.subr.mxu0 0.0
    %52 = vmatpush1.msra.mxu0 0.0
    %53 = vmatprep.subr.mxu0 0.0
    %54 = vmatpush1.msra.mxu0 0.0
    %55 = vmatprep.subr.mxu0 0.0
    %56 = vmatpush1.msra.mxu0 0.0
    %57 = vmatprep.subr.mxu0 0.0
    %58 = vmatpush1.msra.mxu0 0.0
    %59 = vmatprep.subr.mxu0 0.0
    %60 = vmatpush1.msra.mxu0 0.0
    %61 = vmatprep.subr.mxu0 0.0
    %62 = vmatpush1.msra.mxu0 0.0
    %63 = vmatprep.subr.mxu0 0.0
    %64 = vmatpush1.msra.mxu0 0.0
    %65 = vmatprep.subr.mxu0 0.0
    %66 = vmatpush1.msra.mxu0 0.0
    %67 = vmatprep.subr.mxu0 0.0
    %68 = vmatpush1.msra.mxu0 0.0
    %69 = vmatprep.subr.mxu0 0.0
    %70 = vmatpush1.msra.mxu0 0.0
    %71 = vmatprep.subr.mxu0 0.0
    %72 = vmatpush1.msra.mxu0 0.0
    %73 = vmatprep.subr.mxu0 0.0
    %74 = vmatpush1.msra.mxu0 0.0
    %75 = vmatprep.subr.mxu0 0.0
    %76 = vmatpush1.msra.mxu0 0.0
    %77 = vmatprep.subr.mxu0 0.0
    %78 = vmatpush1.msra.mxu0 0.0
    %79 = vmatprep.subr.mxu0 0.0
    %80 = vmatpush1.msra.mxu0 0.0
    %81 = vmatprep.subr.mxu0 0.0
    %82 = vmatpush1.msra.mxu0 0.0
    %83 = vmatprep.subr.mxu0 0.0
    %84 = vmatpush1.msra.mxu0 0.0
    %85 = vmatprep.subr.mxu0 0.0
    %86 = vmatpush1.msra.mxu0 0.0
    %87 = vmatprep.subr.mxu0 0.0
    %88 = vmatpush1.msra.mxu0 0.0
    %89 = vmatprep.subr.mxu0 0.0
    %90 = vmatpush1.msra.mxu0 0.0
    %91 = vmatprep.subr.mxu0 0.0
    %92 = vmatpush1.msra.mxu0 0.0
    %93 = vmatprep.subr.mxu0 0.0
    %94 = vmatpush1.msra.mxu0 0.0
    %95 = vmatprep.subr.mxu0 0.0
    %96 = vmatpush1.msra.mxu0 0.0
    %97 = vmatprep.subr.mxu0 0.0
    %98 = vmatpush1.msra.mxu0 0.0
    %99 = vmatprep.subr.mxu0 0.0
    %100 = vmatpush1.msra.mxu0 0.0
    %101 = vmatprep.subr.mxu0 0.0
    %102 = vmatpush1.msra.mxu0 0.0
    %103 = vmatprep.mubr.f32.mxu0 0.0
    %104 = vmatmul.mubr.f32.gmra.mrb[0].mxu0 %v33
    %v105 = vpop.f32.mrb[0].mxu0
    %v106 = vadd.f32 %v29, %v105
    %v107 = vpop.f32.mrb[0].mxu0
    %108 = vdwg.mxu0
    %v109 = vmax.f32 %v106, 0.0
    %v110 = vld [vmem:[%s3] sm:$0xff]
    %v111 = vld [vmem:[%s3 + $0x8] sm:$0x3]
    %v112 = vld [vmem:[%s4] sm:$0x1]
    %v114 = vlaneseq
    %v115 = vshrl.u32 %v114, 7
    %v116 = vsub.s32 0, %v115
    %v117 = vrot.slane %v112, %v116
    %v120 = vsel %vm31, %v109, 0
    %v123 = vsel %vm35, %v111, 0
    %125 = vmatprep.subr.mxu0 0.0
    %126 = vmatpush1.msra.mxu0 %v110
    %127 = vmatprep.subr.mxu0 0.0
    %128 = vmatpush1.msra.mxu0 %v123
    %129 = vmatprep.subr.mxu0 0.0
    %130 = vmatpush1.msra.mxu0 0.0
    %131 = vmatprep.subr.mxu0 0.0
    %132 = vmatpush1.msra.mxu0 0.0
    %133 = vmatprep.subr.mxu0 0.0
    %134 = vmatpush1.msra.mxu0 0.0
    %135 = vmatprep.subr.mxu0 0.0
    %136 = vmatpush1.msra.mxu0 0.0
    %137 = vmatprep.subr.mxu0 0.0
    %138 = vmatpush1.msra.mxu0 0.0
    %139 = vmatprep.subr.mxu0 0.0
    %140 = vmatpush1.msra.mxu0 0.0
    %141 = vmatprep.subr.mxu0 0.0
    %142 = vmatpush1.msra.mxu0 0.0
    %143 = vmatprep.subr.mxu0 0.0
    %144 = vmatpush1.msra.mxu0 0.0
    %145 = vmatprep.subr.mxu0 0.0
    %146 = vmatpush1.msra.mxu0 0.0
    %147 = vmatprep.subr.mxu0 0.0
    %148 = vmatpush1.msra.mxu0 0.0
    %149 = vmatprep.subr.mxu0 0.0
    %150 = vmatpush1.msra.mxu0 0.0
    %151 = vmatprep.subr.mxu0 0.0
    %152 = vmatpush1.msra.mxu0 0.0
    %153 = vmatprep.subr.mxu0 0.0
    %154 = vmatpush1.msra.mxu0 0.0
    %155 = vmatprep.subr.mxu0 0.0
    %156 = vmatpush1.msra.mxu0 0.0
    %157 = vmatprep.subr.mxu0 0.0
    %158 = vmatpush1.msra.mxu0 0.0
    %159 = vmatprep.subr.mxu0 0.0
    %160 = vmatpush1.msra.mxu0 0.0
    %161 = vmatprep.subr.mxu0 0.0
    %162 = vmatpush1.msra.mxu0 0.0
    %163 = vmatprep.subr.mxu0 0.0
    %164 = vmatpush1.msra.mxu0 0.0
    %165 = vmatprep.subr.mxu0 0.0
    %166 = vmatpush1.msra.mxu0 0.0
    %167 = vmatprep.subr.mxu0 0.0
    %168 = vmatpush1.msra.mxu0 0.0
    %169 = vmatprep.subr.mxu0 0.0
    %170 = vmatpush1.msra.mxu0 0.0
    %171 = vmatprep.subr.mxu0 0.0
    %172 = vmatpush1.msra.mxu0 0.0
    %173 = vmatprep.subr.mxu0 0.0
    %174 = vmatpush1.msra.mxu0 0.0
    %175 = vmatprep.subr.mxu0 0.0
    %176 = vmatpush1.msra.mxu0 0.0
    %177 = vmatprep.subr.mxu0 0.0
    %178 = vmatpush1.msra.mxu0 0.0
    %179 = vmatprep.subr.mxu0 0.0
    %180 = vmatpush1.msra.mxu0 0.0
    %181 = vmatprep.subr.mxu0 0.0
    %182 = vmatpush1.msra.mxu0 0.0
    %183 = vmatprep.subr.mxu0 0.0
    %184 = vmatpush1.msra.mxu0 0.0
    %185 = vmatprep.subr.mxu0 0.0
    %186 = vmatpush1.msra.mxu0 0.0
    %187 = vmatprep.subr.mxu0 0.0
    %188 = vmatpush1.msra.mxu0 0.0
    %189 = vmatprep.mubr.f32.mxu0 0.0
    %190 = vmatmul.mubr.f32.gmra.mrb[0].mxu0 %v120
    %v191 = vpop.f32.mrb[0].mxu0
    %v192 = vadd.f32 %v117, %v191
    %v193 = vpop.f32.mrb[0].mxu0
    %194 = vdwg.mxu0
    %vm195 = vcmask 39936
    %196 = vst.msk [vmem:[#allocation2] sm:$0xff] %vm195, %v192
    // Predicated region
    $region22: #{tpu_custom_call.1} parent=1 // pred_check
      _
    $region23: #{tpu_custom_call.1} parent=1 // pred_check_branch
      %198 = sbr.rel (0) target = $region25
    $region24: #{tpu_custom_call.1} parent=1 // pred_region
      %s200 = ssub.s32 128, 128
      %201 = vsyncadd [#allocation3], %s200
      %s203 = sshll.u32 [#allocation2], 4
      %s204 = int_to_ptr.vmem [resolvable:$true] %s203
      %206 = dma.vmem_to_hbm [thread:$0]  %s204, 128, %s5, [#allocation3]
    $region25: #{tpu_custom_call.1} parent=1 // pred_fallthru
      _
    // Predicated region
    $region26: #{tpu_custom_call.1} parent=1 // pred_check
      _
    $region27: #{tpu_custom_call.1} parent=1 // pred_check_branch
      %208 = sbr.rel (0) target = $region29
    $region28: #{tpu_custom_call.1} parent=1 // pred_region
      %209 = dma.done [#allocation3], 128
    $region29: #{tpu_custom_call.1} parent=1 // pred_fallthru
      _
    %210 = vsyncpa [#allocation3], 1

</llo_original>
